<compile_context>
chip_gen: v7x
topology: tpu7x:2x2x1
jax: 0.10.0
libtpu: 0.0.40
codegen_flags: <defaults>
</compile_context>

<pallas_src>
import jax
import jax.numpy as jnp
from jax.experimental import pallas as pl
from jax.experimental.pallas import tpu as pltpu


def _round_up(x: int, m: int) -> int:
    return (x + m - 1) // m * m


# -----------------------------------------------------------------------------
# Pallas kernel:  relu(state@W1a + option@W1b + b1) -> relu(·@W2 + b2)
#                 -> rowsum(· * w3) + b3
# -----------------------------------------------------------------------------
def value_net_h_kernel(state_ref, option_ref, w1a_ref, w1b_ref, b1_ref,
                       w2_ref, b2_ref, w3_ref, b3_ref, out_ref):
    cdt = w1a_ref.dtype                                     # matmul compute dtype (bf16)

    # ---- layer 1: split-K matmul replaces concat([state, option], 1) --------
    h1 = (jnp.dot(state_ref[...].astype(cdt), w1a_ref[...],
                  preferred_element_type=jnp.float32)
          + jnp.dot(option_ref[...].astype(cdt), w1b_ref[...],
                    preferred_element_type=jnp.float32)
          + b1_ref[...])                                    # (TB, H) f32
    h1 = jnp.maximum(h1, 0.0)                               # ReLU (VPU)

    # ---- layer 2 -------------------------------------------------------------
    h2 = jnp.dot(h1.astype(cdt), w2_ref[...],
                 preferred_element_type=jnp.float32) + b2_ref[...]
    h2 = jnp.maximum(h2, 0.0)                               # ReLU (VPU)

    # ---- layer 3: N=1 matmul -> VPU multiply + XLU row reduction -------------
    q1 = jnp.sum(h2 * w3_ref[...], axis=-1, keepdims=True) + b3_ref[0]
    out_ref[...] = q1.astype(out_ref.dtype)                 # (TB, 1)


def value_net_h_forward(state, option, params, *, block_b=512):
    """Forward pass of Value_net_H.

    state : (B, state_dim) float32
    option: (B, option_dim) float32
    params: dict with w1a,w1b (bf16, (in,H)), b1,b2 (f32, (1,H)),
            w2 (bf16, (H,H)), w3 (f32, (1,H)), b3 (f32, (1,))
    returns (B, 1) float32
    """
    B, state_dim = state.shape
    option_dim = option.shape[1]
    H = params["w1a"].shape[1]

    # Batch tile: a multiple of 8 sublanes, capped at block_b rows.
    tb = min(block_b, _round_up(B, 8))
    b_pad = _round_up(B, tb)
    if b_pad != B:
        state = jnp.pad(state, ((0, b_pad - B), (0, 0)))
        option = jnp.pad(option, ((0, b_pad - B), (0, 0)))
    grid = (b_pad // tb,)

    resident = lambda shp: pl.BlockSpec(shp, lambda i: (0, 0))  # weights stay in VMEM

    out = pl.pallas_call(
        value_net_h_kernel,
        out_shape=jax.ShapeDtypeStruct((b_pad, 1), jnp.float32),
        grid=grid,
        in_specs=[
            pl.BlockSpec((tb, state_dim), lambda i: (i, 0)),    # state (batch-tiled)
            pl.BlockSpec((tb, option_dim), lambda i: (i, 0)),   # option (batch-tiled)
            resident((state_dim, H)),                           # w1a
            resident((option_dim, H)),                          # w1b
            resident((1, H)),                                   # b1
            resident((H, H)),                                   # w2
            resident((1, H)),                                   # b2
            resident((1, H)),                                   # w3 (row layout)
            pl.BlockSpec(memory_space=pltpu.MemorySpace.SMEM),  # b3 scalar
        ],
        out_specs=pl.BlockSpec((tb, 1), lambda i: (i, 0)),
        compiler_params=pltpu.CompilerParams(
            dimension_semantics=("parallel",)),
    )(state, option, params["w1a"], params["w1b"], params["b1"],
      params["w2"], params["b2"], params["w3"], params["b3"])

    return out[:B] if b_pad != B else out


# -----------------------------------------------------------------------------
# Deterministic parameter init (PyTorch-style uniform fan-in bounds)
# -----------------------------------------------------------------------------
def init_params(key, state_dim, option_dim, hidden=256,
                matmul_dtype=jnp.bfloat16):
    in_dim = state_dim + option_dim
    ks = jax.random.split(key, 6)

    def lin(kw, kb, fan_in, fan_out):
        bound = 1.0 / jnp.sqrt(jnp.float32(fan_in))
        w = jax.random.uniform(kw, (fan_in, fan_out), jnp.float32, -bound, bound)
        b = jax.random.uniform(kb, (fan_out,), jnp.float32, -bound, bound)
        return w, b

    w1, b1 = lin(ks[0], ks[1], in_dim, hidden)
    w2, b2 = lin(ks[2], ks[3], hidden, hidden)
    w3, b3 = lin(ks[4], ks[5], hidden, 1)

    return dict(
        # layer-1 weight split row-wise once, so the kernel needs no concat
        w1a=w1[:state_dim].astype(matmul_dtype),
        w1b=w1[state_dim:].astype(matmul_dtype),
        b1=b1.reshape(1, hidden),
        w2=w2.astype(matmul_dtype),
        b2=b2.reshape(1, hidden),
        # layer-3 weight kept as a (1, H) row (PyTorch l3.weight layout) for
        # the VPU-reduction form of the final layer
        w3=w3.reshape(1, hidden).astype(jnp.float32),
        b3=b3.reshape(1),
    )


# Pure-JAX reference (same math / same quantized weights) for correctness check
def reference_forward(state, option, p):
    cdt = p["w1a"].dtype
    so = jnp.concatenate([state, option], axis=1).astype(cdt)
    w1 = jnp.concatenate([p["w1a"], p["w1b"]], axis=0)
    h1 = jnp.maximum(
        jnp.dot(so, w1, preferred_element_type=jnp.float32) + p["b1"], 0.0)
    h2 = jnp.maximum(
        jnp.dot(h1.astype(cdt), p["w2"],
                preferred_element_type=jnp.float32) + p["b2"], 0.0)
    return jnp.sum(h2 * p["w3"], axis=-1, keepdims=True) + p["b3"]


if __name__ == "__main__":
    key = jax.random.PRNGKey(0)
    k_state, k_option, k_params = jax.random.split(key, 3)

    batch, state_dim, option_dim = 8, 32, 8
    state = jax.random.normal(k_state, (batch, state_dim), jnp.float32)
    option = jax.random.normal(k_option, (batch, option_dim), jnp.float32)
    params = init_params(k_params, state_dim, option_dim)

    q1 = value_net_h_forward(state, option, params)
    q1 = jax.block_until_ready(q1)

    ref = reference_forward(state, option, params)
    assert q1.shape == (batch, 1)
    assert jnp.allclose(q1, ref, atol=1e-3, rtol=1e-3), "mismatch vs reference"

    print("KERNEL_OK")
</pallas_src>

<mosaic_0001>
module attributes {stable_mosaic.version = 11 : i64} {
  func.func @value_net_h_kernel(%arg0: i32, %arg1: memref<8x32xf32, #tpu.memory_space<vmem>>, %arg2: memref<8x8xf32, #tpu.memory_space<vmem>>, %arg3: memref<32x256xbf16, #tpu.memory_space<vmem>>, %arg4: memref<8x256xbf16, #tpu.memory_space<vmem>>, %arg5: memref<1x256xf32, #tpu.memory_space<vmem>>, %arg6: memref<256x256xbf16, #tpu.memory_space<vmem>>, %arg7: memref<1x256xf32, #tpu.memory_space<vmem>>, %arg8: memref<1x256xf32, #tpu.memory_space<vmem>>, %arg9: memref<1xf32, #tpu.memory_space<smem>>, %arg10: memref<8x1xf32, #tpu.memory_space<vmem>>) attributes {dimension_semantics = [#tpu.dimension_semantics<parallel>], iteration_bounds = array<i64: 1>, scalar_prefetch = 0 : i64, scratch_operands = 0 : i64, tpu.core_type = #tpu.core_type<tc>, window_params = [{transform_indices = @transform_0, window_bounds = array<i64: 8, 32>}, {transform_indices = @transform_1, window_bounds = array<i64: 8, 8>}, {pipeline_mode = #tpu.pipeline_mode<synchronous>, transform_indices = @transform_2, window_bounds = array<i64: 32, 256>}, {pipeline_mode = #tpu.pipeline_mode<synchronous>, transform_indices = @transform_3, window_bounds = array<i64: 8, 256>}, {pipeline_mode = #tpu.pipeline_mode<synchronous>, transform_indices = @transform_4, window_bounds = array<i64: 1, 256>}, {pipeline_mode = #tpu.pipeline_mode<synchronous>, transform_indices = @transform_5, window_bounds = array<i64: 256, 256>}, {pipeline_mode = #tpu.pipeline_mode<synchronous>, transform_indices = @transform_6, window_bounds = array<i64: 1, 256>}, {pipeline_mode = #tpu.pipeline_mode<synchronous>, transform_indices = @transform_7, window_bounds = array<i64: 1, 256>}, {transform_indices = @transform_8, window_bounds = array<i64: 1>}, {transform_indices = @transform_9, window_bounds = array<i64: 8, 1>}]} {
    %c0 = arith.constant 0 : index
    %c0_0 = arith.constant 0 : index
    %0 = vector.load %arg1[%c0, %c0_0] : memref<8x32xf32, #tpu.memory_space<vmem>>, vector<8x32xf32>
    %1 = arith.truncf %0 : vector<8x32xf32> to vector<8x32xbf16>
    %c0_1 = arith.constant 0 : index
    %c0_2 = arith.constant 0 : index
    %2 = vector.load %arg3[%c0_1, %c0_2] : memref<32x256xbf16, #tpu.memory_space<vmem>>, vector<32x256xbf16>
    %cst = arith.constant dense<0.000000e+00> : vector<8x256xf32>
    %3 = tpu.matmul %1, %2, %cst {dimension_numbers = #tpu.dot_dimension_numbers<[1], [0], [0], [1], [0, 0, 1, 1], [], []>} : vector<8x32xbf16>, vector<32x256xbf16>, vector<8x256xf32> -> vector<8x256xf32>
    %c0_3 = arith.constant 0 : index
    %c0_4 = arith.constant 0 : index
    %4 = vector.load %arg2[%c0_3, %c0_4] : memref<8x8xf32, #tpu.memory_space<vmem>>, vector<8x8xf32>
    %5 = arith.truncf %4 : vector<8x8xf32> to vector<8x8xbf16>
    %c0_5 = arith.constant 0 : index
    %c0_6 = arith.constant 0 : index
    %6 = vector.load %arg4[%c0_5, %c0_6] : memref<8x256xbf16, #tpu.memory_space<vmem>>, vector<8x256xbf16>
    %cst_7 = arith.constant dense<0.000000e+00> : vector<8x256xf32>
    %7 = tpu.matmul %5, %6, %cst_7 {dimension_numbers = #tpu.dot_dimension_numbers<[1], [0], [0], [1], [0, 0, 1, 1], [], []>} : vector<8x8xbf16>, vector<8x256xbf16>, vector<8x256xf32> -> vector<8x256xf32>
    %8 = arith.addf %3, %7 : vector<8x256xf32>
    %c0_8 = arith.constant 0 : index
    %c0_9 = arith.constant 0 : index
    %9 = vector.load %arg5[%c0_8, %c0_9] : memref<1x256xf32, #tpu.memory_space<vmem>>, vector<1x256xf32>
    %10 = vector.broadcast %9 : vector<1x256xf32> to vector<8x256xf32>
    %11 = arith.addf %8, %10 : vector<8x256xf32>
    %cst_10 = arith.constant 0.000000e+00 : f32
    %12 = vector.broadcast %cst_10 : f32 to vector<8x256xf32>
    %13 = arith.maximumf %11, %12 : vector<8x256xf32>
    %14 = arith.truncf %13 : vector<8x256xf32> to vector<8x256xbf16>
    %c0_11 = arith.constant 0 : index
    %c0_12 = arith.constant 0 : index
    %15 = vector.load %arg6[%c0_11, %c0_12] : memref<256x256xbf16, #tpu.memory_space<vmem>>, vector<256x256xbf16>
    %cst_13 = arith.constant dense<0.000000e+00> : vector<8x256xf32>
    %16 = tpu.matmul %14, %15, %cst_13 {dimension_numbers = #tpu.dot_dimension_numbers<[1], [0], [0], [1], [0, 0, 1, 1], [], []>} : vector<8x256xbf16>, vector<256x256xbf16>, vector<8x256xf32> -> vector<8x256xf32>
    %c0_14 = arith.constant 0 : index
    %c0_15 = arith.constant 0 : index
    %17 = vector.load %arg7[%c0_14, %c0_15] : memref<1x256xf32, #tpu.memory_space<vmem>>, vector<1x256xf32>
    %18 = vector.broadcast %17 : vector<1x256xf32> to vector<8x256xf32>
    %19 = arith.addf %16, %18 : vector<8x256xf32>
    %cst_16 = arith.constant 0.000000e+00 : f32
    %20 = vector.broadcast %cst_16 : f32 to vector<8x256xf32>
    %21 = arith.maximumf %19, %20 : vector<8x256xf32>
    %c0_17 = arith.constant 0 : index
    %c0_18 = arith.constant 0 : index
    %22 = vector.load %arg8[%c0_17, %c0_18] : memref<1x256xf32, #tpu.memory_space<vmem>>, vector<1x256xf32>
    %23 = vector.broadcast %22 : vector<1x256xf32> to vector<8x256xf32>
    %24 = arith.mulf %21, %23 : vector<8x256xf32>
    %cst_19 = arith.constant dense<0.000000e+00> : vector<8xf32>
    %25 = vector.multi_reduction <add>, %24, %cst_19 [1] : vector<8x256xf32> to vector<8xf32>
    %26 = vector.shape_cast %25 : vector<8xf32> to vector<8x1xf32>
    %c0_20 = arith.constant 0 : index
    %27 = memref.load %arg9[%c0_20] : memref<1xf32, #tpu.memory_space<smem>>
    %28 = vector.broadcast %27 : f32 to vector<8x1xf32>
    %29 = arith.addf %26, %28 : vector<8x1xf32>
    %c0_21 = arith.constant 0 : index
    %c0_22 = arith.constant 0 : index
    %30 = vector.load %arg10[%c0_21, %c0_22] : memref<8x1xf32, #tpu.memory_space<vmem>>, vector<8x1xf32>
    tpu.vector_store %arg10[%c0_21, %c0_22], %29 {strides = array<i32>} : memref<8x1xf32, #tpu.memory_space<vmem>>, vector<8x1xf32>,
    return
  }
  func.func @transform_0(%arg0: i32) -> (i32, i32) {
    %c0_i32 = arith.constant 0 : i32
    %c0_i32_0 = arith.constant 0 : i32
    return %arg0, %c0_i32 : i32, i32
  }
  func.func @transform_1(%arg0: i32) -> (i32, i32) {
    %c0_i32 = arith.constant 0 : i32
    %c0_i32_0 = arith.constant 0 : i32
    return %arg0, %c0_i32 : i32, i32
  }
  func.func @transform_2(%arg0: i32) -> (i32, i32) {
    %c0_i32 = arith.constant 0 : i32
    %c0_i32_0 = arith.constant 0 : i32
    %c0_i32_1 = arith.constant 0 : i32
    return %c0_i32, %c0_i32_0 : i32, i32
  }
  func.func @transform_3(%arg0: i32) -> (i32, i32) {
    %c0_i32 = arith.constant 0 : i32
    %c0_i32_0 = arith.constant 0 : i32
    %c0_i32_1 = arith.constant 0 : i32
    return %c0_i32, %c0_i32_0 : i32, i32
  }
  func.func @transform_4(%arg0: i32) -> (i32, i32) {
    %c0_i32 = arith.constant 0 : i32
    %c0_i32_0 = arith.constant 0 : i32
    %c0_i32_1 = arith.constant 0 : i32
    return %c0_i32, %c0_i32_0 : i32, i32
  }
  func.func @transform_5(%arg0: i32) -> (i32, i32) {
    %c0_i32 = arith.constant 0 : i32
    %c0_i32_0 = arith.constant 0 : i32
    %c0_i32_1 = arith.constant 0 : i32
    return %c0_i32, %c0_i32_0 : i32, i32
  }
  func.func @transform_6(%arg0: i32) -> (i32, i32) {
    %c0_i32 = arith.constant 0 : i32
    %c0_i32_0 = arith.constant 0 : i32
    %c0_i32_1 = arith.constant 0 : i32
    return %c0_i32, %c0_i32_0 : i32, i32
  }
  func.func @transform_7(%arg0: i32) -> (i32, i32) {
    %c0_i32 = arith.constant 0 : i32
    %c0_i32_0 = arith.constant 0 : i32
    %c0_i32_1 = arith.constant 0 : i32
    return %c0_i32, %c0_i32_0 : i32, i32
  }
  func.func @transform_8(%arg0: i32) -> i32 {
    %c0_i32 = arith.constant 0 : i32
    %c0_i32_0 = arith.constant 0 : i32
    return %c0_i32 : i32
  }
  func.func @transform_9(%arg0: i32) -> (i32, i32) {
    %c0_i32 = arith.constant 0 : i32
    %c0_i32_0 = arith.constant 0 : i32
    return %arg0, %c0_i32 : i32, i32
  }
}

</mosaic_0001>

<llo_original>
// kernel: tpu_custom_call.1
$region0: #{tpu_custom_call.1}
  #allocation0 [shape = 'u32[]', space=smem, size = 0x4, offset = 0x4, fixed_abs, tag = 'smem constant byte address 0x4 - core index']
  #allocation1 [shape = 'u32[144,128]{1,0:T(1,128)}', space=vmem, size = 0x12000, scoped, tag = 'internal scratch']
  #allocation2 [shape = 'f32[1]{0:T(128)S(6)}', space=smem, size = 0x200, scoped, tag = 'scoped memory for tpu_custom_call.1']
  %s0 = inlined_call_operand.hbm [shape: f32[8,32], index: 0, kind: input, shape index: {}]
  %s1 = inlined_call_operand.hbm [shape: f32[8,8], index: 1, kind: input, shape index: {}]
  %s2 = inlined_call_operand.hbm [shape: bf16[32,256], index: 2, kind: input, shape index: {}]
  %s3 = inlined_call_operand.vmem [shape: bf16[8,256], index: 3, kind: input, shape index: {}]
  %s4 = inlined_call_operand.vmem [shape: f32[1,256], index: 4, kind: input, shape index: {}]
  %s5 = inlined_call_operand.hbm [shape: bf16[256,256], index: 5, kind: input, shape index: {}]
  %s6 = inlined_call_operand.vmem [shape: f32[1,256], index: 6, kind: input, shape index: {}]
  %s7 = inlined_call_operand.vmem [shape: f32[1,256], index: 7, kind: input, shape index: {}]
  %s8 = inlined_call_operand.<no memory space> [shape: f32[1], index: 8, kind: input, shape index: {}]
  %s9 = inlined_call_operand.vmem [shape: f32[8,1], index: 9, kind: output, shape index: {}]
  %s10 = sld [smem:[#allocation0]]
  $region62: #{tpu_custom_call.1} parent=0
    _
  %s12 = ssub.s32 1, %s10
  %s13 = scalar_select 0, %s12, %s10
  %14 = sst [smem:[#allocation2]] %s8
  $region1: #{tpu_custom_call.1} parent=0
    #allocation3 [shape = 'u8[4096]{0}', space=vmem, size = 0x1000, scoped, tag = 'input window, operand 0, single buffered']
    #allocation4 [shape = 's32[1]{0}', space=sflag, size = 0x4, scoped, tag = 'scoped memory for tpu_custom_call.1']
    #allocation5 [shape = 'u8[4096]{0}', space=vmem, size = 0x1000, scoped, tag = 'input window, operand 1, single buffered']
    #allocation6 [shape = 's32[1]{0}', space=sflag, size = 0x4, scoped, tag = 'scoped memory for tpu_custom_call.1']
    #allocation7 [shape = 'u8[16384]{0}', space=vmem, size = 0x4000, scoped, tag = 'input window, operand 2, single buffered']
    #allocation8 [shape = 'u8[131072]{0}', space=vmem, size = 0x20000, scoped, tag = 'input window, operand 5, single buffered']
    #allocation9 [shape = 's32[1]{0}', space=sflag, size = 0x4, scoped, tag = 'scoped memory for tpu_custom_call.1']
    %15 = vsyncpa [#allocation4], 0
    %16 = vsyncpa [#allocation6], 0
    %17 = vsyncpa [#allocation9], 0
    // Predicated region
    $region2: #{tpu_custom_call.1} parent=1 // pred_check
      _
    $region3: #{tpu_custom_call.1} parent=1 // pred_check_branch
      %19 = sbr.rel (0) target = $region5
    $region4: #{tpu_custom_call.1} parent=1 // pred_region
      %s21 = ssub.s32 128, 128
      %22 = vsyncadd [#allocation4], %s21
      %s24 = sshll.u32 [#allocation3], 4
      %s25 = int_to_ptr.vmem [resolvable:$true] %s24
      %27 = dma.hbm_to_vmem [thread:$0]  %s0, 128, %s25, [#allocation4]
    $region5: #{tpu_custom_call.1} parent=1 // pred_fallthru
      _
    // Predicated region
    $region6: #{tpu_custom_call.1} parent=1 // pred_check
      _
    $region7: #{tpu_custom_call.1} parent=1 // pred_check_branch
      %29 = sbr.rel (0) target = $region9
    $region8: #{tpu_custom_call.1} parent=1 // pred_region
      %s31 = ssub.s32 128, 128
      %32 = vsyncadd [#allocation6], %s31
      %s34 = sshll.u32 [#allocation5], 4
      %s35 = int_to_ptr.vmem [resolvable:$true] %s34
      %37 = dma.hbm_to_vmem [thread:$0]  %s1, 128, %s35, [#allocation6]
    $region9: #{tpu_custom_call.1} parent=1 // pred_fallthru
      _
    // Predicated region
    $region10: #{tpu_custom_call.1} parent=1 // pred_check
      _
    $region11: #{tpu_custom_call.1} parent=1 // pred_check_branch
      %39 = sbr.rel (0) target = $region13
    $region12: #{tpu_custom_call.1} parent=1 // pred_region
      %s41 = ssub.s32 512, 512
      %42 = vsyncadd [#allocation6], %s41
      %s43 = sshll.u32 [#allocation7], 4
      %s44 = int_to_ptr.vmem [resolvable:$true] %s43
      %49 = dma.hbm_to_vmem [thread:$0]  %s2, 512, %s44, [#allocation6], 128, 128, 8
    $region13: #{tpu_custom_call.1} parent=1 // pred_fallthru
      _
    // Predicated region
    $region14: #{tpu_custom_call.1} parent=1 // pred_check
      _
    $region15: #{tpu_custom_call.1} parent=1 // pred_check_branch
      %51 = sbr.rel (0) target = $region17
    $region16: #{tpu_custom_call.1} parent=1 // pred_region
      _
    $region17: #{tpu_custom_call.1} parent=1 // pred_fallthru
      _
    // Predicated region
    $region18: #{tpu_custom_call.1} parent=1 // pred_check
      _
    $region19: #{tpu_custom_call.1} parent=1 // pred_check_branch
      %53 = sbr.rel (0) target = $region21
    $region20: #{tpu_custom_call.1} parent=1 // pred_region
      _
    $region21: #{tpu_custom_call.1} parent=1 // pred_fallthru
      _
    // Predicated region
    $region22: #{tpu_custom_call.1} parent=1 // pred_check
      _
    $region23: #{tpu_custom_call.1} parent=1 // pred_check_branch
      %55 = sbr.rel (0) target = $region25
    $region24: #{tpu_custom_call.1} parent=1 // pred_region
      %s57 = ssub.s32 4096, 4096
      %58 = vsyncadd [#allocation9], %s57
      %s59 = sshll.u32 [#allocation8], 4
      %s60 = int_to_ptr.vmem [resolvable:$true] %s59
      %65 = dma.hbm_to_vmem [thread:$0]  %s5, 4096, %s60, [#allocation9], 128, 128, 8
    $region25: #{tpu_custom_call.1} parent=1 // pred_fallthru
      _
    // Predicated region
    $region26: #{tpu_custom_call.1} parent=1 // pred_check
      _
    $region27: #{tpu_custom_call.1} parent=1 // pred_check_branch
      %67 = sbr.rel (0) target = $region29
    $region28: #{tpu_custom_call.1} parent=1 // pred_region
      _
    $region29: #{tpu_custom_call.1} parent=1 // pred_fallthru
      _
    // Predicated region
    $region30: #{tpu_custom_call.1} parent=1 // pred_check
      _
    $region31: #{tpu_custom_call.1} parent=1 // pred_check_branch
      %69 = sbr.rel (0) target = $region33
    $region32: #{tpu_custom_call.1} parent=1 // pred_region
      _
    $region33: #{tpu_custom_call.1} parent=1 // pred_fallthru
      _
    // Predicated region
    $region34: #{tpu_custom_call.1} parent=1 // pred_check
      _
    $region35: #{tpu_custom_call.1} parent=1 // pred_check_branch
      %71 = sbr.rel (0) target = $region37
    $region36: #{tpu_custom_call.1} parent=1 // pred_region
      _
    $region37: #{tpu_custom_call.1} parent=1 // pred_fallthru
      _
    // Predicated region
    $region38: #{tpu_custom_call.1} parent=1 // pred_check
      _
    $region39: #{tpu_custom_call.1} parent=1 // pred_check_branch
      %73 = sbr.rel (0) target = $region41
    $region40: #{tpu_custom_call.1} parent=1 // pred_region
      %74 = dma.done [#allocation4], 128
    $region41: #{tpu_custom_call.1} parent=1 // pred_fallthru
      _
    // Predicated region
    $region42: #{tpu_custom_call.1} parent=1 // pred_check
      _
    $region43: #{tpu_custom_call.1} parent=1 // pred_check_branch
      %76 = sbr.rel (0) target = $region45
    $region44: #{tpu_custom_call.1} parent=1 // pred_region
      %77 = dma.done [#allocation6], 128
    $region45: #{tpu_custom_call.1} parent=1 // pred_fallthru
      _
    // Predicated region
    $region46: #{tpu_custom_call.1} parent=1 // pred_check
      _
    $region47: #{tpu_custom_call.1} parent=1 // pred_check_branch
      %79 = sbr.rel (0) target = $region49
    $region48: #{tpu_custom_call.1} parent=1 // pred_region
      %80 = dma.done [#allocation6], 512
    $region49: #{tpu_custom_call.1} parent=1 // pred_fallthru
      _
    // Predicated region
    $region50: #{tpu_custom_call.1} parent=1 // pred_check
      _
    $region51: #{tpu_custom_call.1} parent=1 // pred_check_branch
      %82 = sbr.rel (0) target = $region53
    $region52: #{tpu_custom_call.1} parent=1 // pred_region
      %83 = dma.done [#allocation9], 4096
    $region53: #{tpu_custom_call.1} parent=1 // pred_fallthru
      _
    %v85 = vld [vmem:[#allocation3] sm:$0xff]
    %v86 = vpack.c.bf16 %v85, %v85
    %v87 = vld [vmem:[#allocation7] sm:$0xff]
    %v88 = vld [vmem:[#allocation7 + $0x8] sm:$0xff]
    %v89 = vld [vmem:[#allocation7 + $0x10] sm:$0xff]
    %v90 = vld [vmem:[#allocation7 + $0x18] sm:$0xff]
    %v91 = vld [vmem:[#allocation5] sm:$0xff]
    %v92 = vpack.c.bf16 %v91, %v91
    %v93 = vld [vmem:[%s3] sm:$0xff]
    %v95 = vunpack.c.l.b16 %v93
    %v96 = vunpack.c.h.b16 %v93
    %v97 = vpack.c.b16 %v95, %v95
    %v98 = vpack.c.b16 %v96, %v96
    %vm99 = vcmask 64512
    %v101 = vsel %vm99, %v92, 0
    %vm103 = vcmask 1043456
    %v105 = vsel %vm103, %v97, 0
    %v108 = vsel %vm103, %v98, 0
    %110 = vmatprep.subr.bf16.mxu0 %v108
    %111 = vmatpush1.bf16.msra.mxu0 %v105
    %112 = vmatprep.subr.bf16.mxu0 0
    %113 = vmatpush1.bf16.msra.mxu0 0
    %114 = vmatprep.subr.bf16.mxu0 0
    %115 = vmatpush1.bf16.msra.mxu0 0
    %116 = vmatprep.subr.bf16.mxu0 0
    %117 = vmatpush1.bf16.msra.mxu0 0
    %118 = vmatprep.subr.bf16.mxu0 0
    %119 = vmatpush1.bf16.msra.mxu0 0
    %120 = vmatprep.subr.bf16.mxu0 0
    %121 = vmatpush1.bf16.msra.mxu0 0
    %122 = vmatprep.subr.bf16.mxu0 0
    %123 = vmatpush1.bf16.msra.mxu0 0
    %124 = vmatprep.subr.bf16.mxu0 0
    %125 = vmatpush1.bf16.msra.mxu0 0
    %126 = vmatprep.subr.bf16.mxu0 0
    %127 = vmatpush1.bf16.msra.mxu0 0
    %128 = vmatprep.subr.bf16.mxu0 0
    %129 = vmatpush1.bf16.msra.mxu0 0
    %130 = vmatprep.subr.bf16.mxu0 0
    %131 = vmatpush1.bf16.msra.mxu0 0
    %132 = vmatprep.subr.bf16.mxu0 0
    %133 = vmatpush1.bf16.msra.mxu0 0
    %134 = vmatprep.subr.bf16.mxu0 0
    %135 = vmatpush1.bf16.msra.mxu0 0
    %136 = vmatprep.subr.bf16.mxu0 0
    %137 = vmatpush1.bf16.msra.mxu0 0
    %138 = vmatprep.subr.bf16.mxu0 0
    %139 = vmatpush1.bf16.msra.mxu0 0
    %140 = vmatprep.subr.bf16.mxu0 0
    %141 = vmatpush1.bf16.msra.mxu0 0
    %142 = vmatprep.mubr.bf16.mxu0 0
    %143 = vmatmul.mubr.bf16.gmra.mrb[0].mxu0 %v101
    %v144 = vpop.f32.mrb[0].mxu0
    %v145 = vadd.f32 0.0, %v144
    %v146 = vpop.f32.mrb[0].mxu0
    %v147 = vadd.f32 0.0, %v146
    %v148 = vpop.f32.mrb[0].mxu0
    %v149 = vpop.f32.mrb[0].mxu0
    %150 = vdwg.mxu0
    %v155 = vunpack.c.l.b16 %v87
    %v156 = vunpack.c.h.b16 %v87
    %v157 = vunpack.c.l.b16 %v88
    %v158 = vunpack.c.h.b16 %v88
    %v159 = vunpack.c.l.b16 %v89
    %v160 = vunpack.c.h.b16 %v89
    %v161 = vunpack.c.l.b16 %v90
    %v162 = vunpack.c.h.b16 %v90
    %v163 = vpack.c.b16 %v157, %v155
    %v164 = vpack.c.b16 %v158, %v156
    %v165 = vpack.c.b16 %v161, %v159
    %v166 = vpack.c.b16 %v162, %v160
    %vm171 = vcmask 261120
    %v173 = vsel %vm171, %v86, 0
    %175 = vmatprep.subr.bf16.mxu0 %v164
    %176 = vmatpush1.bf16.msra.mxu0 %v163
    %177 = vmatprep.subr.bf16.mxu0 %v166
    %178 = vmatpush1.bf16.msra.mxu0 %v165
    %179 = vmatprep.subr.bf16.mxu0 0
    %180 = vmatpush1.bf16.msra.mxu0 0
    %181 = vmatprep.subr.bf16.mxu0 0
    %182 = vmatpush1.bf16.msra.mxu0 0
    %183 = vmatprep.subr.bf16.mxu0 0
    %184 = vmatpush1.bf16.msra.mxu0 0
    %185 = vmatprep.subr.bf16.mxu0 0
    %186 = vmatpush1.bf16.msra.mxu0 0
    %187 = vmatprep.subr.bf16.mxu0 0
    %188 = vmatpush1.bf16.msra.mxu0 0
    %189 = vmatprep.subr.bf16.mxu0 0
    %190 = vmatpush1.bf16.msra.mxu0 0
    %191 = vmatprep.subr.bf16.mxu0 0
    %192 = vmatpush1.bf16.msra.mxu0 0
    %193 = vmatprep.subr.bf16.mxu0 0
    %194 = vmatpush1.bf16.msra.mxu0 0
    %195 = vmatprep.subr.bf16.mxu0 0
    %196 = vmatpush1.bf16.msra.mxu0 0
    %197 = vmatprep.subr.bf16.mxu0 0
    %198 = vmatpush1.bf16.msra.mxu0 0
    %199 = vmatprep.subr.bf16.mxu0 0
    %200 = vmatpush1.bf16.msra.mxu0 0
    %201 = vmatprep.subr.bf16.mxu0 0
    %202 = vmatpush1.bf16.msra.mxu0 0
    %203 = vmatprep.subr.bf16.mxu0 0
    %204 = vmatpush1.bf16.msra.mxu0 0
    %205 = vmatprep.subr.bf16.mxu0 0
    %206 = vmatpush1.bf16.msra.mxu0 0
    %207 = vmatprep.mubr.bf16.mxu0 0
    %208 = vmatmul.mubr.bf16.gmra.mrb[0].mxu0 %v173
    %v209 = vpop.f32.mrb[0].mxu0
    %v210 = vadd.f32 %v145, %v209
    %v211 = vpop.f32.mrb[0].mxu0
    %v212 = vadd.f32 %v147, %v211
    %v213 = vpop.f32.mrb[0].mxu0
    %v214 = vpop.f32.mrb[0].mxu0
    %215 = vdwg.mxu0
    %v216 = vld [vmem:[%s4] sm:$0x3]
    %v218 = vlaneseq
    %v219 = vshrl.u32 %v218, 7
    %v220 = vsub.s32 0, %v219
    %v221 = vrot.slane %v216, %v220
    %v222 = vlaneseq
    %v223 = vshrl.u32 %v222, 7
    %v224 = vsub.s32 1, %v223
    %v225 = vrot.slane %v216, %v224
    %v228 = vadd.f32 %v210, %v221
    %v229 = vadd.f32 %v212, %v225
    %v230 = vmax.f32 %v228, 0.0
    %v231 = vmax.f32 %v229, 0.0
    %v232 = vpack.c.bf16 %v230, %v230
    %v233 = vpack.c.bf16 %v231, %v231
    %v234 = vld [vmem:[#allocation8] sm:$0xff]
    %v235 = vld [vmem:[#allocation8 + $0x8] sm:$0xff]
    %v236 = vld [vmem:[#allocation8 + $0x10] sm:$0xff]
    %v237 = vld [vmem:[#allocation8 + $0x18] sm:$0xff]
    %v238 = vld [vmem:[#allocation8 + $0x20] sm:$0xff]
    %v239 = vld [vmem:[#allocation8 + $0x28] sm:$0xff]
    %v240 = vld [vmem:[#allocation8 + $0x30] sm:$0xff]
    %v241 = vld [vmem:[#allocation8 + $0x38] sm:$0xff]
    %v242 = vld [vmem:[#allocation8 + $0x40] sm:$0xff]
    %v243 = vld [vmem:[#allocation8 + $0x48] sm:$0xff]
    %v244 = vld [vmem:[#allocation8 + $0x50] sm:$0xff]
    %v245 = vld [vmem:[#allocation8 + $0x58] sm:$0xff]
    %v246 = vld [vmem:[#allocation8 + $0x60] sm:$0xff]
    %v247 = vld [vmem:[#allocation8 + $0x68] sm:$0xff]
    %v248 = vld [vmem:[#allocation8 + $0x70] sm:$0xff]
    %v249 = vld [vmem:[#allocation8 + $0x78] sm:$0xff]
    %v250 = vld [vmem:[#allocation8 + $0x80] sm:$0xff]
    %v251 = vld [vmem:[#allocation8 + $0x88] sm:$0xff]
    %v252 = vld [vmem:[#allocation8 + $0x90] sm:$0xff]
    %v253 = vld [vmem:[#allocation8 + $0x98] sm:$0xff]
    %v254 = vld [vmem:[#allocation8 + $0xa0] sm:$0xff]
    %v255 = vld [vmem:[#allocation8 + $0xa8] sm:$0xff]
    %v256 = vld [vmem:[#allocation8 + $0xb0] sm:$0xff]
    %v257 = vld [vmem:[#allocation8 + $0xb8] sm:$0xff]
    %v258 = vld [vmem:[#allocation8 + $0xc0] sm:$0xff]
    %v259 = vld [vmem:[#allocation8 + $0xc8] sm:$0xff]
    %v260 = vld [vmem:[#allocation8 + $0xd0] sm:$0xff]
    %v261 = vld [vmem:[#allocation8 + $0xd8] sm:$0xff]
    %v262 = vld [vmem:[#allocation8 + $0xe0] sm:$0xff]
    %v263 = vld [vmem:[#allocation8 + $0xe8] sm:$0xff]
    %v264 = vld [vmem:[#allocation8 + $0xf0] sm:$0xff]
    %v265 = vld [vmem:[#allocation8 + $0xf8] sm:$0xff]
    %v266 = vld [vmem:[%s6] sm:$0x3]
    %v268 = vlaneseq
    %v269 = vshrl.u32 %v268, 7
    %v270 = vsub.s32 0, %v269
    %v271 = vrot.slane %v266, %v270
    %v272 = vlaneseq
    %v273 = vshrl.u32 %v272, 7
    %v274 = vsub.s32 1, %v273
    %v275 = vrot.slane %v266, %v274
    %v310 = vunpack.c.l.b16 %v234
    %v311 = vunpack.c.h.b16 %v234
    %v312 = vunpack.c.l.b16 %v235
    %v313 = vunpack.c.h.b16 %v235
    %v314 = vunpack.c.l.b16 %v236
    %v315 = vunpack.c.h.b16 %v236
    %v316 = vunpack.c.l.b16 %v237
    %v317 = vunpack.c.h.b16 %v237
    %v318 = vunpack.c.l.b16 %v238
    %v319 = vunpack.c.h.b16 %v238
    %v320 = vunpack.c.l.b16 %v239
    %v321 = vunpack.c.h.b16 %v239
    %v322 = vunpack.c.l.b16 %v240
    %v323 = vunpack.c.h.b16 %v240
    %v324 = vunpack.c.l.b16 %v241
    %v325 = vunpack.c.h.b16 %v241
    %v326 = vunpack.c.l.b16 %v242
    %v327 = vunpack.c.h.b16 %v242
    %v328 = vunpack.c.l.b16 %v243
    %v329 = vunpack.c.h.b16 %v243
    %v330 = vunpack.c.l.b16 %v244
    %v331 = vunpack.c.h.b16 %v244
    %v332 = vunpack.c.l.b16 %v245
    %v333 = vunpack.c.h.b16 %v245
    %v334 = vunpack.c.l.b16 %v246
    %v335 = vunpack.c.h.b16 %v246
    %v336 = vunpack.c.l.b16 %v247
    %v337 = vunpack.c.h.b16 %v247
    %v338 = vunpack.c.l.b16 %v248
    %v339 = vunpack.c.h.b16 %v248
    %v340 = vunpack.c.l.b16 %v249
    %v341 = vunpack.c.h.b16 %v249
    %v342 = vunpack.c.l.b16 %v250
    %v343 = vunpack.c.h.b16 %v250
    %v344 = vunpack.c.l.b16 %v251
    %v345 = vunpack.c.h.b16 %v251
    %v346 = vunpack.c.l.b16 %v252
    %v347 = vunpack.c.h.b16 %v252
    %v348 = vunpack.c.l.b16 %v253
    %v349 = vunpack.c.h.b16 %v253
    %v350 = vunpack.c.l.b16 %v254
    %v351 = vunpack.c.h.b16 %v254
    %v352 = vunpack.c.l.b16 %v255
    %v353 = vunpack.c.h.b16 %v255
    %v354 = vunpack.c.l.b16 %v256
    %v355 = vunpack.c.h.b16 %v256
    %v356 = vunpack.c.l.b16 %v257
    %v357 = vunpack.c.h.b16 %v257
    %v358 = vunpack.c.l.b16 %v258
    %v359 = vunpack.c.h.b16 %v258
    %v360 = vunpack.c.l.b16 %v259
    %v361 = vunpack.c.h.b16 %v259
    %v362 = vunpack.c.l.b16 %v260
    %v363 = vunpack.c.h.b16 %v260
    %v364 = vunpack.c.l.b16 %v261
    %v365 = vunpack.c.h.b16 %v261
    %v366 = vunpack.c.l.b16 %v262
    %v367 = vunpack.c.h.b16 %v262
    %v368 = vunpack.c.l.b16 %v263
    %v369 = vunpack.c.h.b16 %v263
    %v370 = vunpack.c.l.b16 %v264
    %v371 = vunpack.c.h.b16 %v264
    %v372 = vunpack.c.l.b16 %v265
    %v373 = vunpack.c.h.b16 %v265
    %v374 = vpack.c.b16 %v312, %v310
    %v375 = vpack.c.b16 %v313, %v311
    %v376 = vpack.c.b16 %v316, %v314
    %v377 = vpack.c.b16 %v317, %v315
    %v378 = vpack.c.b16 %v320, %v318
    %v379 = vpack.c.b16 %v321, %v319
    %v380 = vpack.c.b16 %v324, %v322
    %v381 = vpack.c.b16 %v325, %v323
    %v382 = vpack.c.b16 %v328, %v326
    %v383 = vpack.c.b16 %v329, %v327
    %v384 = vpack.c.b16 %v332, %v330
    %v385 = vpack.c.b16 %v333, %v331
    %v386 = vpack.c.b16 %v336, %v334
    %v387 = vpack.c.b16 %v337, %v335
    %v388 = vpack.c.b16 %v340, %v338
    %v389 = vpack.c.b16 %v341, %v339
    %v390 = vpack.c.b16 %v344, %v342
    %v391 = vpack.c.b16 %v345, %v343
    %v392 = vpack.c.b16 %v348, %v346
    %v393 = vpack.c.b16 %v349, %v347
    %v394 = vpack.c.b16 %v352, %v350
    %v395 = vpack.c.b16 %v353, %v351
    %v396 = vpack.c.b16 %v356, %v354
    %v397 = vpack.c.b16 %v357, %v355
    %v398 = vpack.c.b16 %v360, %v358
    %v399 = vpack.c.b16 %v361, %v359
    %v400 = vpack.c.b16 %v364, %v362
    %v401 = vpack.c.b16 %v365, %v363
    %v402 = vpack.c.b16 %v368, %v366
    %v403 = vpack.c.b16 %v369, %v367
    %v404 = vpack.c.b16 %v372, %v370
    %v405 = vpack.c.b16 %v373, %v371
    %438 = vmatprep.subr.bf16.mxu0 %v375
    %439 = vmatpush1.bf16.msra.mxu0 %v374
    %440 = vmatprep.subr.bf16.mxu0 %v377
    %441 = vmatpush1.bf16.msra.mxu0 %v376
    %442 = vmatprep.subr.bf16.mxu0 %v379
    %443 = vmatpush1.bf16.msra.mxu0 %v378
    %444 = vmatprep.subr.bf16.mxu0 %v381
    %445 = vmatpush1.bf16.msra.mxu0 %v380
    %446 = vmatprep.subr.bf16.mxu0 %v383
    %447 = vmatpush1.bf16.msra.mxu0 %v382
    %448 = vmatprep.subr.bf16.mxu0 %v385
    %449 = vmatpush1.bf16.msra.mxu0 %v384
    %450 = vmatprep.subr.bf16.mxu0 %v387
    %451 = vmatpush1.bf16.msra.mxu0 %v386
    %452 = vmatprep.subr.bf16.mxu0 %v389
    %453 = vmatpush1.bf16.msra.mxu0 %v388
    %454 = vmatprep.subr.bf16.mxu0 %v391
    %455 = vmatpush1.bf16.msra.mxu0 %v390
    %456 = vmatprep.subr.bf16.mxu0 %v393
    %457 = vmatpush1.bf16.msra.mxu0 %v392
    %458 = vmatprep.subr.bf16.mxu0 %v395
    %459 = vmatpush1.bf16.msra.mxu0 %v394
    %460 = vmatprep.subr.bf16.mxu0 %v397
    %461 = vmatpush1.bf16.msra.mxu0 %v396
    %462 = vmatprep.subr.bf16.mxu0 %v399
    %463 = vmatpush1.bf16.msra.mxu0 %v398
    %464 = vmatprep.subr.bf16.mxu0 %v401
    %465 = vmatpush1.bf16.msra.mxu0 %v400
    %466 = vmatprep.subr.bf16.mxu0 %v403
    %467 = vmatpush1.bf16.msra.mxu0 %v402
    %468 = vmatprep.subr.bf16.mxu0 %v405
    %469 = vmatpush1.bf16.msra.mxu0 %v404
    %470 = vmatprep.mubr.bf16.mxu0 %v233
    %471 = vmatmul.mubr.bf16.gmra.mrb[0].mxu0 %v232
    %v472 = vpop.f32.mrb[0].mxu0
    %v473 = vadd.f32 %v271, %v472
    %v474 = vpop.f32.mrb[0].mxu0
    %v475 = vadd.f32 %v275, %v474
    %v476 = vpop.f32.mrb[0].mxu0
    %v477 = vpop.f32.mrb[0].mxu0
    %478 = vdwg.mxu0
    %v479 = vmax.f32 %v473, 0.0
    %v480 = vmax.f32 %v475, 0.0
    %v481 = vld [vmem:[%s7] sm:$0x3]
    %v483 = vlaneseq
    %v484 = vshrl.u32 %v483, 7
    %v485 = vsub.s32 0, %v484
    %v486 = vrot.slane %v481, %v485
    %v487 = vlaneseq
    %v488 = vshrl.u32 %v487, 7
    %v489 = vsub.s32 1, %v488
    %v490 = vrot.slane %v481, %v489
    %v493 = vmul.f32 %v479, %v486
    %v494 = vmul.f32 %v480, %v490
    %v495 = vadd.f32 %v493, %v494
    %496 = vadd.xlane.f32.xlu0 %v495
    %v497 = vpop.xlane.xlu0 %496
    %s498 = sld [smem:[#allocation2]]
    %v499 = vstv %s498
    %v500 = vadd.f32 %v497, %v499
    %vm501 = vcmask 7168
    %502 = vst.msk [vmem:[%s9] sm:$0xff] %vm501, %v500
    // Predicated region
    $region54: #{tpu_custom_call.1} parent=1 // pred_check
      _
    $region55: #{tpu_custom_call.1} parent=1 // pred_check_branch
      %504 = sbr.rel (0) target = $region57
    $region56: #{tpu_custom_call.1} parent=1 // pred_region
      _
    $region57: #{tpu_custom_call.1} parent=1 // pred_fallthru
      _
    // Predicated region
    $region58: #{tpu_custom_call.1} parent=1 // pred_check
      _
    $region59: #{tpu_custom_call.1} parent=1 // pred_check_branch
      %506 = sbr.rel (0) target = $region61
    $region60: #{tpu_custom_call.1} parent=1 // pred_region
      _
    $region61: #{tpu_custom_call.1} parent=1 // pred_fallthru
      _
    %507 = vsyncpa [#allocation4], 1
    %508 = vsyncpa [#allocation6], 1
    %509 = vsyncpa [#allocation9], 1

</llo_original>
